<compile_context>
chip_gen: v5e
topology: v5e:2x2
jax: 0.10.0
libtpu: 0.0.40
codegen_flags: <defaults>
</compile_context>

<pallas_src>
import jax
import jax.numpy as jnp
from jax import lax
from jax.experimental import pallas as pl
from jax.experimental.pallas import tpu as pltpu


# contract dim 1 of LHS with dim 1 of RHS  ==  lhs @ rhs.T  (no transpose op)
_TRANS_B_DIM_NUMBERS = (((1,), (1,)), ((), ()))


def _rotated_swap_kernel(idim_ref, base_ref, src_ref, w_ref, out_ref):
    """One row-tile of the rotated-space interchange intervention."""
    tm = base_ref.shape[0]
    w = w_ref[...]                                            # (Dp, Dp), compute dtype

    # Fuse the two forward rotations into a single MXU pass (one weight push of W).
    lhs = jnp.concatenate([base_ref[...], src_ref[...]], axis=0)        # (2*tm, Dp)
    rot = jnp.dot(lhs, w, preferred_element_type=jnp.float32)           # (2*tm, Dp) f32
    rb = rot[:tm]
    rs = rot[tm:]

    # Interchange the first `interchange_dim` rotated coordinates (f32 select).
    k = idim_ref[0]                                           # scalar from SMEM
    col = lax.broadcasted_iota(jnp.int32, rb.shape, dimension=1)
    mixed = jnp.where(col < k, rs, rb)

    # Rotate back with W^T, expressed as a contraction on W's second dim so the
    # MXU handles the transposed operand (no XLU transpose, no VMEM temp).
    out = lax.dot_general(
        mixed.astype(w.dtype), w,
        dimension_numbers=_TRANS_B_DIM_NUMBERS,
        preferred_element_type=jnp.float32,
    )
    out_ref[...] = out.astype(out_ref.dtype)


def _round_up(x, m):
    return (x + m - 1) // m * m


def rotated_space_intervention(base, source, rotation, interchange_dim, *,
                               block_rows=256, compute_dtype=jnp.bfloat16):
    """base, source: (B, S, D); rotation: (D, D) orthogonal; returns (B, S, D)."""
    assert base.shape == source.shape
    B, S, D = base.shape
    assert rotation.shape == (D, D)
    assert 0 <= interchange_dim <= D

    rows = B * S
    # Lane-dense hidden dim: pad to a multiple of 128 (zero-padding is exact
    # because the padded rows/cols of W are zero).
    Dp = _round_up(D, 128)
    # Row tile: as large as block_rows, shrunk (to a sublane multiple) for small inputs.
    tm = min(block_rows, _round_up(rows, 8))
    rows_p = _round_up(rows, tm)

    def prep(x):
        x2d = x.reshape(rows, D).astype(compute_dtype)
        return jnp.pad(x2d, ((0, rows_p - rows), (0, Dp - D)))

    base2d = prep(base)
    src2d = prep(source)
    rot_p = jnp.pad(rotation.astype(compute_dtype), ((0, Dp - D), (0, Dp - D)))
    idim = jnp.asarray([interchange_dim], dtype=jnp.int32)

    in_bytes = jnp.dtype(compute_dtype).itemsize
    out_bytes = jnp.dtype(base.dtype).itemsize

    # Rough VMEM budget: double-buffered I/O tiles + W + f32 intermediates.
    vmem_est = (2 * (2 * tm * Dp * in_bytes + tm * Dp * out_bytes)
                + 2 * Dp * Dp * in_bytes
                + 4 * tm * Dp * 4)
    vmem_limit = int(min(max(2 * vmem_est, 32 * 1024 * 1024), 96 * 1024 * 1024))

    cost = pl.CostEstimate(
        flops=6 * rows * D * D,
        transcendentals=0,
        bytes_accessed=2 * rows * D * in_bytes + D * D * in_bytes + rows * D * out_bytes,
    )

    out2d = pl.pallas_call(
        _rotated_swap_kernel,
        out_shape=jax.ShapeDtypeStruct((rows_p, Dp), base.dtype),
        grid_spec=pltpu.PrefetchScalarGridSpec(
            num_scalar_prefetch=1,                              # interchange_dim in SMEM
            grid=(rows_p // tm,),
            in_specs=[
                pl.BlockSpec((tm, Dp), lambda i, idim_ref: (i, 0)),   # base row tile
                pl.BlockSpec((tm, Dp), lambda i, idim_ref: (i, 0)),   # source row tile
                pl.BlockSpec((Dp, Dp), lambda i, idim_ref: (0, 0)),   # rotation, constant block
            ],
            out_specs=pl.BlockSpec((tm, Dp), lambda i, idim_ref: (i, 0)),
        ),
        compiler_params=pltpu.CompilerParams(
            dimension_semantics=("parallel",),
            vmem_limit_bytes=vmem_limit,
        ),
        cost_estimate=cost,
    )(idim, base2d, src2d, rot_p)

    return out2d[:rows, :D].reshape(B, S, D)


def _reference(base, source, rotation, interchange_dim, compute_dtype=jnp.bfloat16):
    """Pure-JAX reference mirroring the kernel's dtype flow."""
    w = rotation.astype(compute_dtype)
    rb = jnp.dot(base.astype(compute_dtype), w, preferred_element_type=jnp.float32)
    rs = jnp.dot(source.astype(compute_dtype), w, preferred_element_type=jnp.float32)
    col = jnp.arange(base.shape[-1])
    mixed = jnp.where(col < interchange_dim, rs, rb)
    out = jnp.dot(mixed.astype(compute_dtype), w.T, preferred_element_type=jnp.float32)
    return out.astype(base.dtype)


if __name__ == "__main__":
    key = jax.random.PRNGKey(0)
    k_base, k_src, k_rot = jax.random.split(key, 3)

    B, S, D = 2, 8, 32          # batch, seq, embed_dim
    base = jax.random.normal(k_base, (B, S, D), dtype=jnp.float32)
    source = jax.random.normal(k_src, (B, S, D), dtype=jnp.float32)

    # Deterministic orthogonal rotation matrix (stand-in for the
    # torch.nn.utils.parametrizations.orthogonal(RotateLayer) weight).
    raw = jax.random.normal(k_rot, (D, D), dtype=jnp.float32)
    rotation, _ = jnp.linalg.qr(raw)

    # Two different interchange dims exercise the SMEM-scalar (no-recompile) path.
    for interchange_dim in (16, 5):
        out = rotated_space_intervention(base, source, rotation, interchange_dim)
        out = jax.block_until_ready(out)
        ref = _reference(base, source, rotation, interchange_dim)
        assert out.shape == base.shape and out.dtype == base.dtype
        assert jnp.allclose(out, ref, atol=2e-3, rtol=2e-3)

    print("KERNEL_OK")
</pallas_src>

<mosaic_0001>
module attributes {stable_mosaic.version = 11 : i64} {
  func.func @_rotated_swap_kernel(%arg0: i32, %arg1: memref<1xi32, #tpu.memory_space<smem>>, %arg2: memref<16x128xbf16, #tpu.memory_space<vmem>>, %arg3: memref<16x128xbf16, #tpu.memory_space<vmem>>, %arg4: memref<128x128xbf16, #tpu.memory_space<vmem>>, %arg5: memref<16x128xf32, #tpu.memory_space<vmem>>) attributes {dimension_semantics = [#tpu.dimension_semantics<parallel>], iteration_bounds = array<i64: 1>, scalar_prefetch = 1 : i64, scratch_operands = 0 : i64, tpu.core_type = #tpu.core_type<tc>, window_params = [{transform_indices = @transform_0, window_bounds = array<i64: 16, 128>}, {transform_indices = @transform_1, window_bounds = array<i64: 16, 128>}, {pipeline_mode = #tpu.pipeline_mode<synchronous>, transform_indices = @transform_2, window_bounds = array<i64: 128, 128>}, {transform_indices = @transform_3, window_bounds = array<i64: 16, 128>}]} {
    %c0 = arith.constant 0 : index
    %c0_0 = arith.constant 0 : index
    %0 = vector.load %arg4[%c0, %c0_0] : memref<128x128xbf16, #tpu.memory_space<vmem>>, vector<128x128xbf16>
    %c0_1 = arith.constant 0 : index
    %c0_2 = arith.constant 0 : index
    %1 = vector.load %arg2[%c0_1, %c0_2] : memref<16x128xbf16, #tpu.memory_space<vmem>>, vector<16x128xbf16>
    %c0_3 = arith.constant 0 : index
    %c0_4 = arith.constant 0 : index
    %2 = vector.load %arg3[%c0_3, %c0_4] : memref<16x128xbf16, #tpu.memory_space<vmem>>, vector<16x128xbf16>
    %3 = tpu.concatenate %1, %2 in 0 : vector<16x128xbf16>, vector<16x128xbf16> -> vector<32x128xbf16>
    %cst = arith.constant dense<0.000000e+00> : vector<32x128xf32>
    %4 = tpu.matmul %3, %0, %cst {dimension_numbers = #tpu.dot_dimension_numbers<[1], [0], [0], [1], [0, 0, 1, 1], [], []>} : vector<32x128xbf16>, vector<128x128xbf16>, vector<32x128xf32> -> vector<32x128xf32>
    %5 = vector.extract_strided_slice %4 {offsets = [0, 0], sizes = [16, 128], strides = [1, 1]} : vector<32x128xf32> to vector<16x128xf32>
    %6 = vector.extract_strided_slice %4 {offsets = [16, 0], sizes = [16, 128], strides = [1, 1]} : vector<32x128xf32> to vector<16x128xf32>
    %c0_5 = arith.constant 0 : index
    %7 = memref.load %arg1[%c0_5] : memref<1xi32, #tpu.memory_space<smem>>
    %8 = tpu.iota {dimensions = array<i32: 1>} : vector<16x128xi32>
    %9 = vector.broadcast %7 : i32 to vector<16x128xi32>
    %10 = arith.cmpi slt, %8, %9 : vector<16x128xi32>
    %11 = arith.select %10, %6, %5 : vector<16x128xi1>, vector<16x128xf32>
    %12 = arith.truncf %11 : vector<16x128xf32> to vector<16x128xbf16>
    %cst_6 = arith.constant dense<0.000000e+00> : vector<16x128xf32>
    %13 = tpu.matmul %12, %0, %cst_6 {dimension_numbers = #tpu.dot_dimension_numbers<[1], [1], [0], [0], [0, 0, 1, 0], [], []>} : vector<16x128xbf16>, vector<128x128xbf16>, vector<16x128xf32> -> vector<16x128xf32>
    %c0_7 = arith.constant 0 : index
    %c0_8 = arith.constant 0 : index
    %14 = vector.load %arg5[%c0_7, %c0_8] : memref<16x128xf32, #tpu.memory_space<vmem>>, vector<16x128xf32>
    tpu.vector_store %arg5[%c0_7, %c0_8], %13 {strides = array<i32>} : memref<16x128xf32, #tpu.memory_space<vmem>>, vector<16x128xf32>,
    return
  }
  func.func @transform_0(%arg0: i32, %arg1: memref<1xi32, #tpu.memory_space<smem>>) -> (i32, i32) {
    %c0_i32 = arith.constant 0 : i32
    %c0_i32_0 = arith.constant 0 : i32
    return %arg0, %c0_i32 : i32, i32
  }
  func.func @transform_1(%arg0: i32, %arg1: memref<1xi32, #tpu.memory_space<smem>>) -> (i32, i32) {
    %c0_i32 = arith.constant 0 : i32
    %c0_i32_0 = arith.constant 0 : i32
    return %arg0, %c0_i32 : i32, i32
  }
  func.func @transform_2(%arg0: i32, %arg1: memref<1xi32, #tpu.memory_space<smem>>) -> (i32, i32) {
    %c0_i32 = arith.constant 0 : i32
    %c0_i32_0 = arith.constant 0 : i32
    %c0_i32_1 = arith.constant 0 : i32
    return %c0_i32, %c0_i32_0 : i32, i32
  }
  func.func @transform_3(%arg0: i32, %arg1: memref<1xi32, #tpu.memory_space<smem>>) -> (i32, i32) {
    %c0_i32 = arith.constant 0 : i32
    %c0_i32_0 = arith.constant 0 : i32
    return %arg0, %c0_i32 : i32, i32
  }
}

</mosaic_0001>

<llo_original>
// kernel: tpu_custom_call.1
$region0: #{tpu_custom_call.1}
  #allocation0 [shape = 'u32[]', space=smem, size = 0x4, offset = 0x4, fixed_abs, tag = 'smem constant byte address 0x4 - core index']
  #allocation1 [shape = 'u32[72,128]{1,0:T(1,128)}', space=vmem, size = 0x9000, scoped, tag = 'internal scratch']
  #allocation2 [shape = 's32[1]{0}', space=sflag, size = 0x4, scoped, tag = 'scoped memory for tpu_custom_call.1']
  #allocation3 [shape = 's32[1]{0:T(128)S(6)}', space=smem, size = 0x200, scoped, tag = 'prefetched SMEM operand 0']
  %s0 = inlined_call_operand.<no memory space> [shape: s32[1], index: 0, kind: input, shape index: {}]
  %s1 = inlined_call_operand.hbm [shape: bf16[16,128], index: 1, kind: input, shape index: {}]
  %s2 = inlined_call_operand.hbm [shape: bf16[16,128], index: 2, kind: input, shape index: {}]
  %s3 = inlined_call_operand.hbm [shape: bf16[128,128], index: 3, kind: input, shape index: {}]
  %s4 = inlined_call_operand.hbm [shape: f32[16,128], index: 4, kind: output, shape index: {}]
  %s5 = sld [smem:[#allocation0]]
  $region34: #{tpu_custom_call.1} parent=0
    _
  %s7 = ssub.s32 1, %s5
  %s8 = scalar_select 0, %s7, %s5
  %9 = sst [smem:[#allocation3]] %s0
  $region1: #{tpu_custom_call.1} parent=0
    #allocation4 [shape = 'u8[4096]{0}', space=vmem, size = 0x1000, scoped, tag = 'input window, operand 1, single buffered']
    #allocation5 [shape = 's32[1]{0}', space=sflag, size = 0x4, scoped, tag = 'scoped memory for tpu_custom_call.1']
    #allocation6 [shape = 's32[1]{0}', space=sflag, size = 0x4, scoped, tag = 'scoped memory for tpu_custom_call.1']
    #allocation7 [shape = 'u8[4096]{0}', space=vmem, size = 0x1000, scoped, tag = 'input window, operand 2, single buffered']
    #allocation8 [shape = 's32[1]{0}', space=sflag, size = 0x4, scoped, tag = 'scoped memory for tpu_custom_call.1']
    #allocation9 [shape = 'u8[32768]{0}', space=vmem, size = 0x8000, scoped, tag = 'input window, operand 3, single buffered']
    #allocation10 [shape = 'u8[8192]{0}', space=vmem, size = 0x2000, scoped, tag = 'output window, operand 0, single buffered']
    %10 = vsyncpa [#allocation5], 0
    %11 = vsyncpa [#allocation8], 0
    %12 = vsyncpa [#allocation6], 0
    // Predicated region
    $region2: #{tpu_custom_call.1} parent=1 // pred_check
      _
    $region3: #{tpu_custom_call.1} parent=1 // pred_check_branch
      %14 = sbr.rel (0) target = $region5
    $region4: #{tpu_custom_call.1} parent=1 // pred_region
      %16 = vsyncadd [#allocation5], 0
      %s17 = sshll.u32 %s1, 4
      %s18 = int_to_ptr.hbm [resolvable:$true] %s17
      %s19 = sshll.u32 [#allocation4], 4
      %s20 = int_to_ptr.vmem [resolvable:$true] %s19
      %25 = dma.hbm_to_vmem [thread:$0]  %s18, 128, %s20, [#allocation5], 64, 64, 4
    $region5: #{tpu_custom_call.1} parent=1 // pred_fallthru
      _
    // Predicated region
    $region6: #{tpu_custom_call.1} parent=1 // pred_check
      _
    $region7: #{tpu_custom_call.1} parent=1 // pred_check_branch
      %27 = sbr.rel (0) target = $region9
    $region8: #{tpu_custom_call.1} parent=1 // pred_region
      %29 = vsyncadd [#allocation8], 0
      %s30 = sshll.u32 %s2, 4
      %s31 = int_to_ptr.hbm [resolvable:$true] %s30
      %s32 = sshll.u32 [#allocation7], 4
      %s33 = int_to_ptr.vmem [resolvable:$true] %s32
      %38 = dma.hbm_to_vmem [thread:$0]  %s31, 128, %s33, [#allocation8], 64, 64, 4
    $region9: #{tpu_custom_call.1} parent=1 // pred_fallthru
      _
    // Predicated region
    $region10: #{tpu_custom_call.1} parent=1 // pred_check
      _
    $region11: #{tpu_custom_call.1} parent=1 // pred_check_branch
      %40 = sbr.rel (0) target = $region13
    $region12: #{tpu_custom_call.1} parent=1 // pred_region
      %42 = vsyncadd [#allocation8], 0
      %s43 = sshll.u32 %s3, 4
      %s44 = int_to_ptr.hbm [resolvable:$true] %s43
      %s45 = sshll.u32 [#allocation9], 4
      %s46 = int_to_ptr.vmem [resolvable:$true] %s45
      %51 = dma.hbm_to_vmem [thread:$0]  %s44, 1024, %s46, [#allocation8], 64, 64, 4
    $region13: #{tpu_custom_call.1} parent=1 // pred_fallthru
      _
    // Predicated region
    $region14: #{tpu_custom_call.1} parent=1 // pred_check
      _
    $region15: #{tpu_custom_call.1} parent=1 // pred_check_branch
      %53 = sbr.rel (0) target = $region17
    $region16: #{tpu_custom_call.1} parent=1 // pred_region
      %55 = dma.done [#allocation5], 128
    $region17: #{tpu_custom_call.1} parent=1 // pred_fallthru
      _
    // Predicated region
    $region18: #{tpu_custom_call.1} parent=1 // pred_check
      _
    $region19: #{tpu_custom_call.1} parent=1 // pred_check_branch
      %57 = sbr.rel (0) target = $region21
    $region20: #{tpu_custom_call.1} parent=1 // pred_region
      %59 = dma.done [#allocation8], 128
    $region21: #{tpu_custom_call.1} parent=1 // pred_fallthru
      _
    // Predicated region
    $region22: #{tpu_custom_call.1} parent=1 // pred_check
      _
    $region23: #{tpu_custom_call.1} parent=1 // pred_check_branch
      %61 = sbr.rel (0) target = $region25
    $region24: #{tpu_custom_call.1} parent=1 // pred_region
      %63 = dma.done [#allocation8], 1024
    $region25: #{tpu_custom_call.1} parent=1 // pred_fallthru
      _
    %v64 = vld [vmem:[#allocation9] sm:$0xf]
    %v65 = vld [vmem:[#allocation9 + $0x4] sm:$0xf]
    %v66 = vld [vmem:[#allocation9 + $0x8] sm:$0xf]
    %v67 = vld [vmem:[#allocation9 + $0xc] sm:$0xf]
    %v68 = vld [vmem:[#allocation9 + $0x10] sm:$0xf]
    %v69 = vld [vmem:[#allocation9 + $0x14] sm:$0xf]
    %v70 = vld [vmem:[#allocation9 + $0x18] sm:$0xf]
    %v71 = vld [vmem:[#allocation9 + $0x1c] sm:$0xf]
    %v72 = vld [vmem:[#allocation9 + $0x20] sm:$0xf]
    %v73 = vld [vmem:[#allocation9 + $0x24] sm:$0xf]
    %v74 = vld [vmem:[#allocation9 + $0x28] sm:$0xf]
    %v75 = vld [vmem:[#allocation9 + $0x2c] sm:$0xf]
    %v76 = vld [vmem:[#allocation9 + $0x30] sm:$0xf]
    %v77 = vld [vmem:[#allocation9 + $0x34] sm:$0xf]
    %v78 = vld [vmem:[#allocation9 + $0x38] sm:$0xf]
    %v79 = vld [vmem:[#allocation9 + $0x3c] sm:$0xf]
    %v80 = vld [vmem:[#allocation4] sm:$0xf]
    %v81 = vld [vmem:[#allocation4 + $0x4] sm:$0xf]
    %v82 = vld [vmem:[#allocation7] sm:$0xf]
    %v83 = vld [vmem:[#allocation7 + $0x4] sm:$0xf]
    %v86 = vunpack.c.l.b16 %v80
    %v87 = vunpack.c.l.b16 %v81
    %v88 = vpack.c.b16 %v87, %v86
    %v92 = vunpack.c.l.b16 %v82
    %v93 = vunpack.c.l.b16 %v83
    %v94 = vpack.c.b16 %v93, %v92
    %v112 = vunpack.c.l.b16 %v64
    %v113 = vunpack.c.l.b16 %v65
    %v114 = vunpack.c.l.b16 %v66
    %v115 = vunpack.c.l.b16 %v67
    %v116 = vunpack.c.l.b16 %v68
    %v117 = vunpack.c.l.b16 %v69
    %v118 = vunpack.c.l.b16 %v70
    %v119 = vunpack.c.l.b16 %v71
    %v120 = vunpack.c.l.b16 %v72
    %v121 = vunpack.c.l.b16 %v73
    %v122 = vunpack.c.l.b16 %v74
    %v123 = vunpack.c.l.b16 %v75
    %v124 = vunpack.c.l.b16 %v76
    %v125 = vunpack.c.l.b16 %v77
    %v126 = vunpack.c.l.b16 %v78
    %v127 = vunpack.c.l.b16 %v79
    %v128 = vpack.c.b16 %v113, %v112
    %v129 = vpack.c.b16 %v115, %v114
    %v130 = vpack.c.b16 %v117, %v116
    %v131 = vpack.c.b16 %v119, %v118
    %v132 = vpack.c.b16 %v121, %v120
    %v133 = vpack.c.b16 %v123, %v122
    %v134 = vpack.c.b16 %v125, %v124
    %v135 = vpack.c.b16 %v127, %v126
    %144 = vmatpush.bf16.msra.mxu0 %v135
    %145 = vmatpush.bf16.msra.mxu0 %v134
    %146 = vmatpush.bf16.msra.mxu0 %v133
    %147 = vmatpush.bf16.msra.mxu0 %v132
    %148 = vmatpush.bf16.msra.mxu0 %v131
    %149 = vmatpush.bf16.msra.mxu0 %v130
    %150 = vmatpush.bf16.msra.mxu0 %v129
    %151 = vmatpush.bf16.msra.mxu0 %v128
    %152 = vmatmul.bf16.gmra.mxu0 %v88
    %v153 = vpop.f32.mrf.mxu0
    %v154 = vadd.f32 0.0, %v153
    %v155 = vpop.f32.mrf.mxu0
    %v156 = vadd.f32 0.0, %v155
    %157 = vmatmul.bf16.gmra.mxu0 %v94
    %v158 = vpop.f32.mrf.mxu0
    %v159 = vadd.f32 0.0, %v158
    %v160 = vpop.f32.mrf.mxu0
    %v161 = vadd.f32 0.0, %v160
    %162 = vdwg.mxu0
    %s163 = sld [smem:[#allocation3]]
    %v164 = vlaneseq
    %v165 = vand.u32 %v164, 127
    %v166 = vstv %s163
    %vm167 = vcmp.lt.s32.totalorder %v165, %v166
    %v168 = vsel %vm167, %v159, %v154
    %v169 = vsel %vm167, %v161, %v156
    %v170 = vpack.c.bf16 %v169, %v168
    %171 = vmatpush.bf16.xpose.msra.mxu0 %v135
    %172 = vmatpush.bf16.xpose.msra.mxu0 %v134
    %173 = vmatpush.bf16.xpose.msra.mxu0 %v133
    %174 = vmatpush.bf16.xpose.msra.mxu0 %v132
    %175 = vmatpush.bf16.xpose.msra.mxu0 %v131
    %176 = vmatpush.bf16.xpose.msra.mxu0 %v130
    %177 = vmatpush.bf16.xpose.msra.mxu0 %v129
    %178 = vmatpush.bf16.xpose.msra.mxu0 %v128
    %179 = vmatmul.bf16.gmra.mxu0 %v170
    %v180 = vpop.f32.mrf.mxu0
    %v181 = vadd.f32 0.0, %v180
    %v182 = vpop.f32.mrf.mxu0
    %v183 = vadd.f32 0.0, %v182
    %184 = vdwg.mxu0
    %185 = vst [vmem:[#allocation10] sm:$0xff] %v181
    %186 = vst [vmem:[#allocation10 + $0x8] sm:$0xff] %v183
    // Predicated region
    $region26: #{tpu_custom_call.1} parent=1 // pred_check
      _
    $region27: #{tpu_custom_call.1} parent=1 // pred_check_branch
      %188 = sbr.rel (0) target = $region29
    $region28: #{tpu_custom_call.1} parent=1 // pred_region
      %190 = vsyncadd [#allocation6], 0
      %s191 = sshll.u32 [#allocation10], 4
      %s192 = int_to_ptr.vmem [resolvable:$true] %s191
      %s193 = sshll.u32 %s4, 4
      %s194 = int_to_ptr.hbm [resolvable:$true] %s193
      %199 = dma.vmem_to_hbm [thread:$0]  %s192, 256, %s194, [#allocation6], 128, 128, 8
    $region29: #{tpu_custom_call.1} parent=1 // pred_fallthru
      _
    // Predicated region
    $region30: #{tpu_custom_call.1} parent=1 // pred_check
      _
    $region31: #{tpu_custom_call.1} parent=1 // pred_check_branch
      %201 = sbr.rel (0) target = $region33
    $region32: #{tpu_custom_call.1} parent=1 // pred_region
      %203 = dma.done [#allocation6], 256
    $region33: #{tpu_custom_call.1} parent=1 // pred_fallthru
      _
    %204 = vsyncpa [#allocation5], 1
    %205 = vsyncpa [#allocation8], 1
    %206 = vsyncpa [#allocation6], 1

</llo_original>
